<compile_context>
chip_gen: v7x
topology: tpu7x:2x2x1
jax: 0.10.0
libtpu: 0.0.40
codegen_flags: <defaults>
</compile_context>

<pallas_src>
import jax
import jax.numpy as jnp
from jax.experimental import pallas as pl
from jax.experimental.pallas import tpu as pltpu


def actor_net_kernel(state_ref, w1_ref, b1_ref, w2_ref, b2_ref, out_ref):
    """Fused fc1 -> ReLU -> fc_actor with batch on the 128-lane axis.

    state_ref : (S, TB)  batch tile, lane-dense
    w1_ref    : (H, S)   PyTorch layout; already MXU-ready for W1 @ state
    b1_ref    : (H, 1)   column bias -> free lane broadcast
    w2_ref    : (A, H)
    b2_ref    : (A, 1)
    out_ref   : (A, TB)  lane-dense output -> unmasked vst
    """
    # fc1: (H, S) @ (S, TB) -> f32 accumulate; bias add + ReLU in f32 on the VPU.
    h = jnp.dot(w1_ref[...], state_ref[...],
                preferred_element_type=jnp.float32)          # (H, TB)
    h = jnp.maximum(h + b1_ref[...], 0.0)

    # fc_actor: (A, H) @ (H, TB) -> f32 accumulate; bias add in f32.
    if w2_ref.dtype != jnp.float32:                          # skip no-op cast in f32 path
        h = h.astype(w2_ref.dtype)
    scores = jnp.dot(w2_ref[...], h,
                     preferred_element_type=jnp.float32)     # (A, TB)
    out_ref[...] = (scores + b2_ref[...]).astype(out_ref.dtype)


def actor_net_forward(state, w1, b1, w2, b2, *, block_b=16384, compute_dtype=None):
    """Fused ActorNet forward: relu(state @ W1.T + b1) @ W2.T + b2.

    Weights are accepted in PyTorch convention W:[out_features, in_features];
    in the batch-on-lanes layout that is already the layout the MXU wants, so
    no weight transpose happens anywhere. `compute_dtype` (e.g. jnp.bfloat16)
    controls matmul operand precision; accumulation and elementwise math stay
    in f32.
    """
    batch, n_states = state.shape
    n_hid_1 = w1.shape[0]
    n_actions = w2.shape[0]

    if compute_dtype is None:
        compute_dtype = jnp.float32

    # ---- one-time layout prep (wrapper-side; no in-kernel shuffles) --------
    w1_c = jnp.asarray(w1, compute_dtype)                         # (H, S)
    w2_c = jnp.asarray(w2, compute_dtype)                         # (A, H)
    b1_col = jnp.asarray(b1, jnp.float32).reshape(n_hid_1, 1)     # (H, 1)
    b2_col = jnp.asarray(b2, jnp.float32).reshape(n_actions, 1)   # (A, 1)
    state_t = jnp.asarray(state, compute_dtype).T                 # (S, B): batch -> lanes

    # ---- batch tiling: batch sits on lanes, so pad/tile in multiples of 128.
    lane = 128
    padded_b = max(lane, ((batch + lane - 1) // lane) * lane)
    tb = min(block_b, padded_b)
    tb = max(lane, (tb // lane) * lane)
    padded_b = ((padded_b + tb - 1) // tb) * tb
    if padded_b != batch:
        state_t = jnp.pad(state_t, ((0, 0), (0, padded_b - batch)))

    grid = (padded_b // tb,)

    bytes_per_elem = jnp.dtype(compute_dtype).itemsize
    cost = pl.CostEstimate(
        flops=2 * padded_b * (n_states * n_hid_1 + n_hid_1 * n_actions),
        transcendentals=0,
        bytes_accessed=padded_b * n_states * bytes_per_elem            # state in
        + padded_b * n_actions * 4                                     # scores out
        + (n_states * n_hid_1 + n_hid_1 * n_actions) * bytes_per_elem  # weights
        + (n_hid_1 + n_actions) * 4,                                   # biases
    )

    out_t = pl.pallas_call(
        actor_net_kernel,
        out_shape=jax.ShapeDtypeStruct((n_actions, padded_b), jnp.float32),
        grid=grid,
        in_specs=[
            pl.BlockSpec((n_states, tb), lambda i: (0, i)),        # batch-tiled, lane-dense
            pl.BlockSpec((n_hid_1, n_states), lambda i: (0, 0)),   # resident
            pl.BlockSpec((n_hid_1, 1), lambda i: (0, 0)),          # resident
            pl.BlockSpec((n_actions, n_hid_1), lambda i: (0, 0)),  # resident
            pl.BlockSpec((n_actions, 1), lambda i: (0, 0)),        # resident
        ],
        out_specs=pl.BlockSpec((n_actions, tb), lambda i: (0, i)), # lane-dense output
        compiler_params=pltpu.CompilerParams(
            dimension_semantics=("parallel",),
        ),
        cost_estimate=cost,
    )(state_t, w1_c, b1_col, w2_c, b2_col)

    # Un-transpose and drop padded columns (padded columns hold relu(b1)@W2+b2
    # garbage by construction; they are sliced off here and never reused).
    return out_t.T[:batch]


def init_params(key, n_states, n_actions, n_hid_1):
    # Deterministic init mimicking nn.Linear's uniform(-1/sqrt(fan_in), 1/sqrt(fan_in)).
    k1, k2, k3, k4 = jax.random.split(key, 4)
    lim1 = 1.0 / jnp.sqrt(n_states)
    lim2 = 1.0 / jnp.sqrt(n_hid_1)
    w1 = jax.random.uniform(k1, (n_hid_1, n_states), jnp.float32, -lim1, lim1)
    b1 = jax.random.uniform(k2, (n_hid_1,), jnp.float32, -lim1, lim1)
    w2 = jax.random.uniform(k3, (n_actions, n_hid_1), jnp.float32, -lim2, lim2)
    b2 = jax.random.uniform(k4, (n_actions,), jnp.float32, -lim2, lim2)
    return w1, b1, w2, b2


def _reference(state, w1, b1, w2, b2):
    return jnp.maximum(state @ w1.T + b1, 0.0) @ w2.T + b2


if __name__ == "__main__":
    # LunarLander-like dims: n_states=8, n_actions=4; small hidden.
    n_states, n_actions, n_hid_1 = 8, 4, 32

    key = jax.random.PRNGKey(0)
    k_state_small, k_state_big, k_params = jax.random.split(key, 3)
    w1, b1, w2, b2 = init_params(k_params, n_states, n_actions, n_hid_1)

    # 1) Small batch (padded to a single 128-lane tile, grid=(1,)).
    state_small = jax.random.normal(k_state_small, (2, n_states), jnp.float32)
    out_small = jax.block_until_ready(
        actor_net_forward(state_small, w1, b1, w2, b2))
    ref_small = _reference(state_small, w1, b1, w2, b2)
    assert out_small.shape == (2, n_actions)
    assert jnp.allclose(out_small, ref_small, atol=1e-5, rtol=1e-5)

    # 2) Larger, non-multiple batch: pads to 1024 lanes, single block (grid=(1,)).
    state_big = jax.random.normal(k_state_big, (1000, n_states), jnp.float32)
    out_big = jax.block_until_ready(
        actor_net_forward(state_big, w1, b1, w2, b2))
    ref_big = _reference(state_big, w1, b1, w2, b2)
    assert out_big.shape == (1000, n_actions)
    assert jnp.allclose(out_big, ref_big, atol=1e-4, rtol=1e-4)

    # 3) Same batch with a small block_b to exercise the multi-step batch grid
    #    (padded 1024 lanes / tb=256 -> 4 "parallel" grid steps).
    out_tiled = jax.block_until_ready(
        actor_net_forward(state_big, w1, b1, w2, b2, block_b=256))
    assert out_tiled.shape == (1000, n_actions)
    assert jnp.allclose(out_tiled, ref_big, atol=1e-4, rtol=1e-4)

    # 4) bf16 operand path (f32 accumulation/elementwise): looser tolerance.
    out_bf16 = jax.block_until_ready(
        actor_net_forward(state_big, w1, b1, w2, b2, compute_dtype=jnp.bfloat16))
    assert out_bf16.shape == (1000, n_actions)
    assert jnp.allclose(out_bf16, ref_big, atol=5e-2, rtol=5e-2)

    print("KERNEL_OK")
</pallas_src>

<mosaic_0001>
module attributes {stable_mosaic.version = 11 : i64} {
  func.func @actor_net_kernel(%arg0: i32, %arg1: memref<8x128xf32, #tpu.memory_space<vmem>>, %arg2: memref<32x8xf32, #tpu.memory_space<vmem>>, %arg3: memref<32x1xf32, #tpu.memory_space<vmem>>, %arg4: memref<4x32xf32, #tpu.memory_space<vmem>>, %arg5: memref<4x1xf32, #tpu.memory_space<vmem>>, %arg6: memref<4x128xf32, #tpu.memory_space<vmem>>) attributes {dimension_semantics = [#tpu.dimension_semantics<parallel>], iteration_bounds = array<i64: 1>, scalar_prefetch = 0 : i64, scratch_operands = 0 : i64, tpu.core_type = #tpu.core_type<tc>, window_params = [{transform_indices = @transform_0, window_bounds = array<i64: 8, 128>}, {pipeline_mode = #tpu.pipeline_mode<synchronous>, transform_indices = @transform_1, window_bounds = array<i64: 32, 8>}, {pipeline_mode = #tpu.pipeline_mode<synchronous>, transform_indices = @transform_2, window_bounds = array<i64: 32, 1>}, {pipeline_mode = #tpu.pipeline_mode<synchronous>, transform_indices = @transform_3, window_bounds = array<i64: 4, 32>}, {pipeline_mode = #tpu.pipeline_mode<synchronous>, transform_indices = @transform_4, window_bounds = array<i64: 4, 1>}, {transform_indices = @transform_5, window_bounds = array<i64: 4, 128>}]} {
    %c0 = arith.constant 0 : index
    %c0_0 = arith.constant 0 : index
    %0 = vector.load %arg2[%c0, %c0_0] : memref<32x8xf32, #tpu.memory_space<vmem>>, vector<32x8xf32>
    %c0_1 = arith.constant 0 : index
    %c0_2 = arith.constant 0 : index
    %1 = vector.load %arg1[%c0_1, %c0_2] : memref<8x128xf32, #tpu.memory_space<vmem>>, vector<8x128xf32>
    %cst = arith.constant dense<0.000000e+00> : vector<32x128xf32>
    %2 = tpu.matmul %0, %1, %cst {dimension_numbers = #tpu.dot_dimension_numbers<[1], [0], [0], [1], [0, 0, 1, 1], [], []>} : vector<32x8xf32>, vector<8x128xf32>, vector<32x128xf32> -> vector<32x128xf32>
    %c0_3 = arith.constant 0 : index
    %c0_4 = arith.constant 0 : index
    %3 = vector.load %arg3[%c0_3, %c0_4] : memref<32x1xf32, #tpu.memory_space<vmem>>, vector<32x1xf32>
    %4 = vector.broadcast %3 : vector<32x1xf32> to vector<32x128xf32>
    %5 = arith.addf %2, %4 : vector<32x128xf32>
    %cst_5 = arith.constant 0.000000e+00 : f32
    %6 = vector.broadcast %cst_5 : f32 to vector<32x128xf32>
    %7 = arith.maximumf %5, %6 : vector<32x128xf32>
    %c0_6 = arith.constant 0 : index
    %c0_7 = arith.constant 0 : index
    %8 = vector.load %arg4[%c0_6, %c0_7] : memref<4x32xf32, #tpu.memory_space<vmem>>, vector<4x32xf32>
    %cst_8 = arith.constant dense<0.000000e+00> : vector<4x128xf32>
    %9 = tpu.matmul %8, %7, %cst_8 {dimension_numbers = #tpu.dot_dimension_numbers<[1], [0], [0], [1], [0, 0, 1, 1], [], []>} : vector<4x32xf32>, vector<32x128xf32>, vector<4x128xf32> -> vector<4x128xf32>
    %c0_9 = arith.constant 0 : index
    %c0_10 = arith.constant 0 : index
    %10 = vector.load %arg5[%c0_9, %c0_10] : memref<4x1xf32, #tpu.memory_space<vmem>>, vector<4x1xf32>
    %11 = vector.broadcast %10 : vector<4x1xf32> to vector<4x128xf32>
    %12 = arith.addf %9, %11 : vector<4x128xf32>
    %c0_11 = arith.constant 0 : index
    %c0_12 = arith.constant 0 : index
    %13 = vector.load %arg6[%c0_11, %c0_12] : memref<4x128xf32, #tpu.memory_space<vmem>>, vector<4x128xf32>
    tpu.vector_store %arg6[%c0_11, %c0_12], %12 {strides = array<i32>} : memref<4x128xf32, #tpu.memory_space<vmem>>, vector<4x128xf32>,
    return
  }
  func.func @transform_0(%arg0: i32) -> (i32, i32) {
    %c0_i32 = arith.constant 0 : i32
    %c0_i32_0 = arith.constant 0 : i32
    return %c0_i32, %arg0 : i32, i32
  }
  func.func @transform_1(%arg0: i32) -> (i32, i32) {
    %c0_i32 = arith.constant 0 : i32
    %c0_i32_0 = arith.constant 0 : i32
    %c0_i32_1 = arith.constant 0 : i32
    return %c0_i32, %c0_i32_0 : i32, i32
  }
  func.func @transform_2(%arg0: i32) -> (i32, i32) {
    %c0_i32 = arith.constant 0 : i32
    %c0_i32_0 = arith.constant 0 : i32
    %c0_i32_1 = arith.constant 0 : i32
    return %c0_i32, %c0_i32_0 : i32, i32
  }
  func.func @transform_3(%arg0: i32) -> (i32, i32) {
    %c0_i32 = arith.constant 0 : i32
    %c0_i32_0 = arith.constant 0 : i32
    %c0_i32_1 = arith.constant 0 : i32
    return %c0_i32, %c0_i32_0 : i32, i32
  }
  func.func @transform_4(%arg0: i32) -> (i32, i32) {
    %c0_i32 = arith.constant 0 : i32
    %c0_i32_0 = arith.constant 0 : i32
    %c0_i32_1 = arith.constant 0 : i32
    return %c0_i32, %c0_i32_0 : i32, i32
  }
  func.func @transform_5(%arg0: i32) -> (i32, i32) {
    %c0_i32 = arith.constant 0 : i32
    %c0_i32_0 = arith.constant 0 : i32
    return %c0_i32, %arg0 : i32, i32
  }
}

</mosaic_0001>

<llo_original>
// kernel: tpu_custom_call.1
$region0: #{tpu_custom_call.1}
  #allocation0 [shape = 'u32[]', space=smem, size = 0x4, offset = 0x4, fixed_abs, tag = 'smem constant byte address 0x4 - core index']
  #allocation1 [shape = 'u32[144,128]{1,0:T(1,128)}', space=vmem, size = 0x12000, scoped, tag = 'internal scratch']
  %s0 = inlined_call_operand.vmem [shape: f32[8,128], index: 0, kind: input, shape index: {}]
  %s1 = inlined_call_operand.vmem [shape: f32[32,8], index: 1, kind: input, shape index: {}]
  %s2 = inlined_call_operand.vmem [shape: f32[32,1], index: 2, kind: input, shape index: {}]
  %s3 = inlined_call_operand.vmem [shape: f32[4,32], index: 3, kind: input, shape index: {}]
  %s4 = inlined_call_operand.vmem [shape: f32[4,1], index: 4, kind: input, shape index: {}]
  %s5 = inlined_call_operand.hbm [shape: f32[4,128], index: 5, kind: output, shape index: {}]
  %s6 = sld [smem:[#allocation0]]
  $region30: #{tpu_custom_call.1} parent=0
    _
  %s8 = ssub.s32 1, %s6
  %s9 = scalar_select 0, %s8, %s6
  $region1: #{tpu_custom_call.1} parent=0
    #allocation2 [shape = 'u8[2048]{0}', space=vmem, size = 0x800, scoped, tag = 'output window, operand 0, single buffered']
    #allocation3 [shape = 's32[1]{0}', space=sflag, size = 0x4, scoped, tag = 'scoped memory for tpu_custom_call.1']
    %10 = vsyncpa [#allocation3], 0
    // Predicated region
    $region2: #{tpu_custom_call.1} parent=1 // pred_check
      _
    $region3: #{tpu_custom_call.1} parent=1 // pred_check_branch
      %12 = sbr.rel (0) target = $region5
    $region4: #{tpu_custom_call.1} parent=1 // pred_region
      _
    $region5: #{tpu_custom_call.1} parent=1 // pred_fallthru
      _
    // Predicated region
    $region6: #{tpu_custom_call.1} parent=1 // pred_check
      _
    $region7: #{tpu_custom_call.1} parent=1 // pred_check_branch
      %14 = sbr.rel (0) target = $region9
    $region8: #{tpu_custom_call.1} parent=1 // pred_region
      _
    $region9: #{tpu_custom_call.1} parent=1 // pred_fallthru
      _
    // Predicated region
    $region10: #{tpu_custom_call.1} parent=1 // pred_check
      _
    $region11: #{tpu_custom_call.1} parent=1 // pred_check_branch
      %16 = sbr.rel (0) target = $region13
    $region12: #{tpu_custom_call.1} parent=1 // pred_region
      _
    $region13: #{tpu_custom_call.1} parent=1 // pred_fallthru
      _
    // Predicated region
    $region14: #{tpu_custom_call.1} parent=1 // pred_check
      _
    $region15: #{tpu_custom_call.1} parent=1 // pred_check_branch
      %18 = sbr.rel (0) target = $region17
    $region16: #{tpu_custom_call.1} parent=1 // pred_region
      _
    $region17: #{tpu_custom_call.1} parent=1 // pred_fallthru
      _
    // Predicated region
    $region18: #{tpu_custom_call.1} parent=1 // pred_check
      _
    $region19: #{tpu_custom_call.1} parent=1 // pred_check_branch
      %20 = sbr.rel (0) target = $region21
    $region20: #{tpu_custom_call.1} parent=1 // pred_region
      _
    $region21: #{tpu_custom_call.1} parent=1 // pred_fallthru
      _
    %v21 = vld [vmem:[%s1] sm:$0xff]
    %v22 = vld [vmem:[%s1 + $0x8] sm:$0xff]
    %v23 = vld [vmem:[%s1 + $0x10] sm:$0xff]
    %v24 = vld [vmem:[%s1 + $0x18] sm:$0xff]
    %v25 = vld [vmem:[%s0] sm:$0xff]
    %v26 = vld [vmem:[%s2] sm:$0xff]
    %v27 = vld [vmem:[%s2 + $0x8] sm:$0xff]
    %v28 = vld [vmem:[%s2 + $0x10] sm:$0xff]
    %v29 = vld [vmem:[%s2 + $0x18] sm:$0xff]
    %31 = vset.pattern.permute.xlu0 0
    %32 = vperm.xlu0 %31, %v26
    %v33 = vpop.permute.xlu0 %32
    %36 = vset.pattern.permute.xlu0 0
    %37 = vperm.xlu0 %36, %v27
    %v38 = vpop.permute.xlu0 %37
    %41 = vset.pattern.permute.xlu0 0
    %42 = vperm.xlu0 %41, %v28
    %v43 = vpop.permute.xlu0 %42
    %46 = vset.pattern.permute.xlu0 0
    %47 = vperm.xlu0 %46, %v29
    %v48 = vpop.permute.xlu0 %47
    %vm50 = vcmask 64512
    %v52 = vsel %vm50, %v21, 0
    %v55 = vsel %vm50, %v22, 0
    %v58 = vsel %vm50, %v23, 0
    %v61 = vsel %vm50, %v24, 0
    %63 = vmatprep.subr.mxu0 0.0
    %64 = vmatpush1.msra.mxu0 %v25
    %65 = vmatprep.subr.mxu0 0.0
    %66 = vmatpush1.msra.mxu0 0.0
    %67 = vmatprep.subr.mxu0 0.0
    %68 = vmatpush1.msra.mxu0 0.0
    %69 = vmatprep.subr.mxu0 0.0
    %70 = vmatpush1.msra.mxu0 0.0
    %71 = vmatprep.subr.mxu0 0.0
    %72 = vmatpush1.msra.mxu0 0.0
    %73 = vmatprep.subr.mxu0 0.0
    %74 = vmatpush1.msra.mxu0 0.0
    %75 = vmatprep.subr.mxu0 0.0
    %76 = vmatpush1.msra.mxu0 0.0
    %77 = vmatprep.subr.mxu0 0.0
    %78 = vmatpush1.msra.mxu0 0.0
    %79 = vmatprep.subr.mxu0 0.0
    %80 = vmatpush1.msra.mxu0 0.0
    %81 = vmatprep.subr.mxu0 0.0
    %82 = vmatpush1.msra.mxu0 0.0
    %83 = vmatprep.subr.mxu0 0.0
    %84 = vmatpush1.msra.mxu0 0.0
    %85 = vmatprep.subr.mxu0 0.0
    %86 = vmatpush1.msra.mxu0 0.0
    %87 = vmatprep.subr.mxu0 0.0
    %88 = vmatpush1.msra.mxu0 0.0
    %89 = vmatprep.subr.mxu0 0.0
    %90 = vmatpush1.msra.mxu0 0.0
    %91 = vmatprep.subr.mxu0 0.0
    %92 = vmatpush1.msra.mxu0 0.0
    %93 = vmatprep.subr.mxu0 0.0
    %94 = vmatpush1.msra.mxu0 0.0
    %95 = vmatprep.subr.mxu0 0.0
    %96 = vmatpush1.msra.mxu0 0.0
    %97 = vmatprep.subr.mxu0 0.0
    %98 = vmatpush1.msra.mxu0 0.0
    %99 = vmatprep.subr.mxu0 0.0
    %100 = vmatpush1.msra.mxu0 0.0
    %101 = vmatprep.subr.mxu0 0.0
    %102 = vmatpush1.msra.mxu0 0.0
    %103 = vmatprep.subr.mxu0 0.0
    %104 = vmatpush1.msra.mxu0 0.0
    %105 = vmatprep.subr.mxu0 0.0
    %106 = vmatpush1.msra.mxu0 0.0
    %107 = vmatprep.subr.mxu0 0.0
    %108 = vmatpush1.msra.mxu0 0.0
    %109 = vmatprep.subr.mxu0 0.0
    %110 = vmatpush1.msra.mxu0 0.0
    %111 = vmatprep.subr.mxu0 0.0
    %112 = vmatpush1.msra.mxu0 0.0
    %113 = vmatprep.subr.mxu0 0.0
    %114 = vmatpush1.msra.mxu0 0.0
    %115 = vmatprep.subr.mxu0 0.0
    %116 = vmatpush1.msra.mxu0 0.0
    %117 = vmatprep.subr.mxu0 0.0
    %118 = vmatpush1.msra.mxu0 0.0
    %119 = vmatprep.subr.mxu0 0.0
    %120 = vmatpush1.msra.mxu0 0.0
    %121 = vmatprep.subr.mxu0 0.0
    %122 = vmatpush1.msra.mxu0 0.0
    %123 = vmatprep.subr.mxu0 0.0
    %124 = vmatpush1.msra.mxu0 0.0
    %125 = vmatprep.subr.mxu0 0.0
    %126 = vmatpush1.msra.mxu0 0.0
    %127 = vmatprep.mubr.f32.mxu0 0.0
    %128 = vmatmul.mubr.f32.gmra.mrb[0].mxu0 %v52
    %v129 = vpop.f32.mrb[0].mxu0
    %v130 = vadd.f32 %v33, %v129
    %v131 = vpop.f32.mrb[0].mxu0
    %132 = vmatprep.mubr.f32.mxu0 0.0
    %133 = vmatmul.mubr.f32.gmra.mrb[0].mxu0 %v55
    %v134 = vpop.f32.mrb[0].mxu0
    %v135 = vadd.f32 %v38, %v134
    %v136 = vpop.f32.mrb[0].mxu0
    %137 = vmatprep.mubr.f32.mxu0 0.0
    %138 = vmatmul.mubr.f32.gmra.mrb[0].mxu0 %v58
    %v139 = vpop.f32.mrb[0].mxu0
    %v140 = vadd.f32 %v43, %v139
    %v141 = vpop.f32.mrb[0].mxu0
    %142 = vmatprep.mubr.f32.mxu0 0.0
    %143 = vmatmul.mubr.f32.gmra.mrb[0].mxu0 %v61
    %v144 = vpop.f32.mrb[0].mxu0
    %v145 = vadd.f32 %v48, %v144
    %v146 = vpop.f32.mrb[0].mxu0
    %147 = vdwg.mxu0
    %v148 = vmax.f32 %v130, 0.0
    %v149 = vmax.f32 %v135, 0.0
    %v150 = vmax.f32 %v140, 0.0
    %v151 = vmax.f32 %v145, 0.0
    %v152 = vld [vmem:[%s3] sm:$0xf]
    %v153 = vld [vmem:[%s4] sm:$0xf]
    %155 = vset.pattern.permute.xlu0 0
    %156 = vperm.xlu0 %155, %v153
    %v157 = vpop.permute.xlu0 %156
    %vm159 = vcmask 261120
    %v161 = vsel %vm159, %v152, 0
    %163 = vmatprep.subr.mxu0 0.0
    %164 = vmatpush1.msra.mxu0 %v148
    %165 = vmatprep.subr.mxu0 0.0
    %166 = vmatpush1.msra.mxu0 %v149
    %167 = vmatprep.subr.mxu0 0.0
    %168 = vmatpush1.msra.mxu0 %v150
    %169 = vmatprep.subr.mxu0 0.0
    %170 = vmatpush1.msra.mxu0 %v151
    %171 = vmatprep.subr.mxu0 0.0
    %172 = vmatpush1.msra.mxu0 0.0
    %173 = vmatprep.subr.mxu0 0.0
    %174 = vmatpush1.msra.mxu0 0.0
    %175 = vmatprep.subr.mxu0 0.0
    %176 = vmatpush1.msra.mxu0 0.0
    %177 = vmatprep.subr.mxu0 0.0
    %178 = vmatpush1.msra.mxu0 0.0
    %179 = vmatprep.subr.mxu0 0.0
    %180 = vmatpush1.msra.mxu0 0.0
    %181 = vmatprep.subr.mxu0 0.0
    %182 = vmatpush1.msra.mxu0 0.0
    %183 = vmatprep.subr.mxu0 0.0
    %184 = vmatpush1.msra.mxu0 0.0
    %185 = vmatprep.subr.mxu0 0.0
    %186 = vmatpush1.msra.mxu0 0.0
    %187 = vmatprep.subr.mxu0 0.0
    %188 = vmatpush1.msra.mxu0 0.0
    %189 = vmatprep.subr.mxu0 0.0
    %190 = vmatpush1.msra.mxu0 0.0
    %191 = vmatprep.subr.mxu0 0.0
    %192 = vmatpush1.msra.mxu0 0.0
    %193 = vmatprep.subr.mxu0 0.0
    %194 = vmatpush1.msra.mxu0 0.0
    %195 = vmatprep.subr.mxu0 0.0
    %196 = vmatpush1.msra.mxu0 0.0
    %197 = vmatprep.subr.mxu0 0.0
    %198 = vmatpush1.msra.mxu0 0.0
    %199 = vmatprep.subr.mxu0 0.0
    %200 = vmatpush1.msra.mxu0 0.0
    %201 = vmatprep.subr.mxu0 0.0
    %202 = vmatpush1.msra.mxu0 0.0
    %203 = vmatprep.subr.mxu0 0.0
    %204 = vmatpush1.msra.mxu0 0.0
    %205 = vmatprep.subr.mxu0 0.0
    %206 = vmatpush1.msra.mxu0 0.0
    %207 = vmatprep.subr.mxu0 0.0
    %208 = vmatpush1.msra.mxu0 0.0
    %209 = vmatprep.subr.mxu0 0.0
    %210 = vmatpush1.msra.mxu0 0.0
    %211 = vmatprep.subr.mxu0 0.0
    %212 = vmatpush1.msra.mxu0 0.0
    %213 = vmatprep.subr.mxu0 0.0
    %214 = vmatpush1.msra.mxu0 0.0
    %215 = vmatprep.subr.mxu0 0.0
    %216 = vmatpush1.msra.mxu0 0.0
    %217 = vmatprep.subr.mxu0 0.0
    %218 = vmatpush1.msra.mxu0 0.0
    %219 = vmatprep.subr.mxu0 0.0
    %220 = vmatpush1.msra.mxu0 0.0
    %221 = vmatprep.subr.mxu0 0.0
    %222 = vmatpush1.msra.mxu0 0.0
    %223 = vmatprep.subr.mxu0 0.0
    %224 = vmatpush1.msra.mxu0 0.0
    %225 = vmatprep.subr.mxu0 0.0
    %226 = vmatpush1.msra.mxu0 0.0
    %227 = vmatprep.mubr.f32.mxu0 0.0
    %228 = vmatmul.mubr.f32.gmra.mrb[0].mxu0 %v161
    %v229 = vpop.f32.mrb[0].mxu0
    %v230 = vadd.f32 %v157, %v229
    %v231 = vpop.f32.mrb[0].mxu0
    %232 = vdwg.mxu0
    %233 = vst [vmem:[#allocation2] sm:$0xf] %v230
    // Predicated region
    $region22: #{tpu_custom_call.1} parent=1 // pred_check
      _
    $region23: #{tpu_custom_call.1} parent=1 // pred_check_branch
      %235 = sbr.rel (0) target = $region25
    $region24: #{tpu_custom_call.1} parent=1 // pred_region
      %s237 = ssub.s32 64, 64
      %238 = vsyncadd [#allocation3], %s237
      %s240 = sshll.u32 [#allocation2], 4
      %s241 = int_to_ptr.vmem [resolvable:$true] %s240
      %243 = dma.vmem_to_hbm [thread:$0]  %s241, 64, %s5, [#allocation3]
    $region25: #{tpu_custom_call.1} parent=1 // pred_fallthru
      _
    // Predicated region
    $region26: #{tpu_custom_call.1} parent=1 // pred_check
      _
    $region27: #{tpu_custom_call.1} parent=1 // pred_check_branch
      %245 = sbr.rel (0) target = $region29
    $region28: #{tpu_custom_call.1} parent=1 // pred_region
      %246 = dma.done [#allocation3], 64
    $region29: #{tpu_custom_call.1} parent=1 // pred_fallthru
      _
    %247 = vsyncpa [#allocation3], 1

</llo_original>
